<compile_context>
chip_gen: v7x
topology: tpu7x:2x2x1
jax: 0.10.0
libtpu: 0.0.40
codegen_flags: <defaults>
</compile_context>

<pallas_src>
import jax
import jax.numpy as jnp
from jax.experimental import pallas as pl
from jax.experimental.pallas import tpu as pltpu


def _normalize_kernel(params_ref, x_ref, o_ref):
    # params_ref: (block_rows, 2) float32 -> column 0 = mean, column 1 = std.
    # x_ref, o_ref: (block_rows, block_cols) lane-dense tiles.
    p = params_ref[...]
    mean = p[:, 0:1]
    std = p[:, 1:2]
    x = x_ref[...].astype(jnp.float32)
    # True divide (not multiply-by-reciprocal): bit-exact vs torch's .div(),
    # and effectively free since this kernel is HBM-bandwidth bound.
    o_ref[...] = ((x - mean) / std).astype(o_ref.dtype)


def _round_up(x, m):
    return ((x + m - 1) // m) * m


def _tile_byte_budget():
    """Target bytes for one x tile; double-buffered in+out ~= 4x this."""
    try:
        kind = jax.devices()[0].device_kind.lower()
    except Exception:
        kind = ""
    if "v5" in kind:
        return 2 << 20   # v5e: 16 MiB default scoped VMEM -> 4 x 2 MiB footprint
    if "v6" in kind:
        return 4 << 20   # v6e: 32 MiB scoped -> 4 x 4 MiB
    if "v7" in kind or "7x" in kind:
        return 8 << 20   # v7x: 3.2 TB/s HBM; 4 x 8 MiB fits 32 MiB scoped / 64 MiB phys
    return 2 << 20       # unknown generation: conservative, safe everywhere


def _largest_divisor_block(dim, unit, cap):
    """Largest multiple of `unit` that divides `dim` and is <= cap (requires dim % unit == 0)."""
    b = max(unit, (min(cap, dim) // unit) * unit)
    while dim % b != 0:
        b -= unit
    return b


def normalizer_forward(x, mean, std):
    """Pallas equivalent of Normalizer.forward / normalize_fn."""
    N, C, H, W = x.shape
    R, HW = N * C, H * W
    itemsize = jnp.dtype(x.dtype).itemsize
    sub = max(8, 32 // itemsize)   # dtype-aware sublane unit: f32->8, bf16->16, int8->32

    # Lane-dense 2D view: rows = fused (N, C), cols = fused (H, W).
    x2 = x.reshape(R, HW)

    # Per-row (mean, std) packed into a single (R, 2) float32 operand.
    params = jnp.stack(
        [jnp.tile(mean.astype(jnp.float32), N),
         jnp.tile(std.astype(jnp.float32), N)],
        axis=-1,
    )

    budget_elems = max(1, _tile_byte_budget() // itemsize)

    # Prefer full-width column blocks (contiguous HBM slabs); mandatory when HW
    # is not 128-aligned (block may then equal the full dim).
    full_width = (HW % 128 != 0) or (sub * HW <= budget_elems)
    if full_width:
        block_cols = HW
        tgt = max(sub, (budget_elems // HW) // sub * sub)
        # Keep >=2 row steps when R permits, so v7x megacore has work on the
        # leading "parallel" axis.
        cap = _round_up(pl.cdiv(R, 2), sub)
        block_rows = max(sub, min(tgt, cap, _round_up(R, sub)))
    else:
        # HW is 128-aligned but one full-width row slab exceeds the budget.
        block_rows = sub
        block_cols = _largest_divisor_block(HW, 128, max(128, budget_elems // sub))

    # Pad rows so block_rows always divides R; padded rows use mean=0, std=1.
    R_pad = _round_up(R, block_rows)
    if R_pad != R:
        x2 = jnp.pad(x2, ((0, R_pad - R), (0, 0)))
        pad_params = jnp.tile(jnp.array([[0.0, 1.0]], dtype=jnp.float32),
                              (R_pad - R, 1))
        params = jnp.concatenate([params, pad_params], axis=0)

    n_rows = R_pad // block_rows
    # If the row grid collapsed to one fat full-width block, split columns so a
    # second TensorCore (v7x) gets work -- only worth it for non-tiny tiles.
    if (n_rows == 1 and block_cols == HW and HW % 256 == 0
            and R_pad * HW * itemsize >= (1 << 20)):
        block_cols = HW // 2
    n_cols = HW // block_cols

    if n_cols == 1:
        grid = (n_rows,)
        p_map = lambda i: (i, 0)
        x_map = lambda i: (i, 0)
        dims = ("parallel",)
    else:
        grid = (n_rows, n_cols)
        p_map = lambda i, j: (i, 0)
        x_map = lambda i, j: (i, j)
        dims = ("parallel", "parallel")

    out2 = pl.pallas_call(
        _normalize_kernel,
        out_shape=jax.ShapeDtypeStruct((R_pad, HW), x.dtype),
        grid=grid,
        in_specs=[
            pl.BlockSpec((block_rows, 2), p_map),            # packed (mean, std), f32
            pl.BlockSpec((block_rows, block_cols), x_map),   # x tile
        ],
        out_specs=pl.BlockSpec((block_rows, block_cols), x_map),
        compiler_params=pltpu.CompilerParams(dimension_semantics=dims),
    )(params, x2)

    if R_pad != R:
        out2 = out2[:R]
    return out2.reshape(N, C, H, W)


if __name__ == "__main__":
    key = jax.random.PRNGKey(0)
    N, C, H, W = 2, 4, 16, 16

    # The module's registered buffers (per-channel mean/std).
    mean = jnp.array([0.485, 0.456, 0.406, 0.5], dtype=jnp.float32)
    std = jnp.array([0.229, 0.224, 0.225, 0.25], dtype=jnp.float32)

    x = jax.random.normal(key, (N, C, H, W), dtype=jnp.float32)

    out = jax.block_until_ready(normalizer_forward(x, mean, std))

    # Pure-JAX reference (same math as normalize_fn).
    ref = (x - mean[None, :, None, None]) / std[None, :, None, None]
    assert out.shape == x.shape and out.dtype == x.dtype
    assert jnp.allclose(out, ref, atol=1e-6, rtol=1e-6)

    print("KERNEL_OK")
</pallas_src>

<mosaic_0001>
module attributes {stable_mosaic.version = 11 : i64} {
  func.func @_normalize_kernel(%arg0: i32, %arg1: memref<8x2xf32, #tpu.memory_space<vmem>>, %arg2: memref<8x256xf32, #tpu.memory_space<vmem>>, %arg3: memref<8x256xf32, #tpu.memory_space<vmem>>) attributes {dimension_semantics = [#tpu.dimension_semantics<parallel>], iteration_bounds = array<i64: 1>, scalar_prefetch = 0 : i64, scratch_operands = 0 : i64, tpu.core_type = #tpu.core_type<tc>, window_params = [{transform_indices = @transform_0, window_bounds = array<i64: 8, 2>}, {transform_indices = @transform_1, window_bounds = array<i64: 8, 256>}, {transform_indices = @transform_2, window_bounds = array<i64: 8, 256>}]} {
    %c0 = arith.constant 0 : index
    %c0_0 = arith.constant 0 : index
    %0 = vector.load %arg1[%c0, %c0_0] : memref<8x2xf32, #tpu.memory_space<vmem>>, vector<8x2xf32>
    %1 = vector.extract_strided_slice %0 {offsets = [0, 0], sizes = [8, 1], strides = [1, 1]} : vector<8x2xf32> to vector<8x1xf32>
    %2 = vector.extract_strided_slice %0 {offsets = [0, 1], sizes = [8, 1], strides = [1, 1]} : vector<8x2xf32> to vector<8x1xf32>
    %c0_1 = arith.constant 0 : index
    %c0_2 = arith.constant 0 : index
    %3 = vector.load %arg2[%c0_1, %c0_2] : memref<8x256xf32, #tpu.memory_space<vmem>>, vector<8x256xf32>
    %4 = vector.broadcast %1 : vector<8x1xf32> to vector<8x256xf32>
    %5 = arith.subf %3, %4 : vector<8x256xf32>
    %6 = vector.broadcast %2 : vector<8x1xf32> to vector<8x256xf32>
    %7 = arith.divf %5, %6 : vector<8x256xf32>
    %c0_3 = arith.constant 0 : index
    %c0_4 = arith.constant 0 : index
    %8 = vector.load %arg3[%c0_3, %c0_4] : memref<8x256xf32, #tpu.memory_space<vmem>>, vector<8x256xf32>
    tpu.vector_store %arg3[%c0_3, %c0_4], %7 {strides = array<i32>} : memref<8x256xf32, #tpu.memory_space<vmem>>, vector<8x256xf32>,
    return
  }
  func.func @transform_0(%arg0: i32) -> (i32, i32) {
    %c0_i32 = arith.constant 0 : i32
    %c0_i32_0 = arith.constant 0 : i32
    return %arg0, %c0_i32 : i32, i32
  }
  func.func @transform_1(%arg0: i32) -> (i32, i32) {
    %c0_i32 = arith.constant 0 : i32
    %c0_i32_0 = arith.constant 0 : i32
    return %arg0, %c0_i32 : i32, i32
  }
  func.func @transform_2(%arg0: i32) -> (i32, i32) {
    %c0_i32 = arith.constant 0 : i32
    %c0_i32_0 = arith.constant 0 : i32
    return %arg0, %c0_i32 : i32, i32
  }
}

</mosaic_0001>

<llo_original>
// kernel: tpu_custom_call.1
$region0: #{tpu_custom_call.1}
  #allocation0 [shape = 'u32[]', space=smem, size = 0x4, offset = 0x4, fixed_abs, tag = 'smem constant byte address 0x4 - core index']
  #allocation1 [shape = 'u32[144,128]{1,0:T(1,128)}', space=vmem, size = 0x12000, scoped, tag = 'internal scratch']
  %s0 = inlined_call_operand.vmem [shape: f32[8,2], index: 0, kind: input, shape index: {}]
  %s1 = inlined_call_operand.hbm [shape: f32[8,256], index: 1, kind: input, shape index: {}]
  %s2 = inlined_call_operand.hbm [shape: f32[8,256], index: 2, kind: output, shape index: {}]
  %s3 = sld [smem:[#allocation0]]
  $region22: #{tpu_custom_call.1} parent=0
    _
  %s5 = ssub.s32 1, %s3
  %s6 = scalar_select 0, %s5, %s3
  $region1: #{tpu_custom_call.1} parent=0
    #allocation2 [shape = 'u8[8192]{0}', space=vmem, size = 0x2000, scoped, tag = 'input window, operand 1, single buffered']
    #allocation3 [shape = 's32[1]{0}', space=sflag, size = 0x4, scoped, tag = 'scoped memory for tpu_custom_call.1']
    #allocation4 [shape = 's32[1]{0}', space=sflag, size = 0x4, scoped, tag = 'scoped memory for tpu_custom_call.1']
    #allocation5 [shape = 'u8[8192]{0}', space=vmem, size = 0x2000, scoped, tag = 'output window, operand 0, single buffered']
    %7 = vsyncpa [#allocation3], 0
    %8 = vsyncpa [#allocation4], 0
    // Predicated region
    $region2: #{tpu_custom_call.1} parent=1 // pred_check
      _
    $region3: #{tpu_custom_call.1} parent=1 // pred_check_branch
      %10 = sbr.rel (0) target = $region5
    $region4: #{tpu_custom_call.1} parent=1 // pred_region
      _
    $region5: #{tpu_custom_call.1} parent=1 // pred_fallthru
      _
    // Predicated region
    $region6: #{tpu_custom_call.1} parent=1 // pred_check
      _
    $region7: #{tpu_custom_call.1} parent=1 // pred_check_branch
      %12 = sbr.rel (0) target = $region9
    $region8: #{tpu_custom_call.1} parent=1 // pred_region
      %s14 = ssub.s32 256, 256
      %15 = vsyncadd [#allocation3], %s14
      %s17 = sshll.u32 [#allocation2], 4
      %s18 = int_to_ptr.vmem [resolvable:$true] %s17
      %20 = dma.hbm_to_vmem [thread:$0]  %s1, 256, %s18, [#allocation3]
    $region9: #{tpu_custom_call.1} parent=1 // pred_fallthru
      _
    // Predicated region
    $region10: #{tpu_custom_call.1} parent=1 // pred_check
      _
    $region11: #{tpu_custom_call.1} parent=1 // pred_check_branch
      %22 = sbr.rel (0) target = $region13
    $region12: #{tpu_custom_call.1} parent=1 // pred_region
      %23 = dma.done [#allocation3], 256
    $region13: #{tpu_custom_call.1} parent=1 // pred_fallthru
      _
    %v24 = vld [vmem:[%s0] sm:$0xff]
    %v25 = vld [vmem:[#allocation2] sm:$0xff]
    %v26 = vld [vmem:[#allocation2 + $0x8] sm:$0xff]
    %28 = vset.pattern.permute.xlu0 0
    %29 = vperm.xlu0 %28, %v24
    %v30 = vpop.permute.xlu0 %29
    %v32 = vsub.f32 %v25, %v30
    %v33 = vsub.f32 %v26, %v30
    %34 = vset.pattern.permute.xlu0 1
    %35 = vperm.xlu0 %34, %v24
    %v36 = vpop.permute.xlu0 %35
    %v38 = vrcp.pop %v36
    %v39 = vmul.f32 %v32, %v38
    %v40 = vmul.f32 %v33, %v38
    %41 = vst [vmem:[#allocation5] sm:$0xff] %v39
    %42 = vst [vmem:[#allocation5 + $0x8] sm:$0xff] %v40
    // Predicated region
    $region14: #{tpu_custom_call.1} parent=1 // pred_check
      _
    $region15: #{tpu_custom_call.1} parent=1 // pred_check_branch
      %44 = sbr.rel (0) target = $region17
    $region16: #{tpu_custom_call.1} parent=1 // pred_region
      %s46 = ssub.s32 256, 256
      %47 = vsyncadd [#allocation4], %s46
      %s49 = sshll.u32 [#allocation5], 4
      %s50 = int_to_ptr.vmem [resolvable:$true] %s49
      %52 = dma.vmem_to_hbm [thread:$0]  %s50, 256, %s2, [#allocation4]
    $region17: #{tpu_custom_call.1} parent=1 // pred_fallthru
      _
    // Predicated region
    $region18: #{tpu_custom_call.1} parent=1 // pred_check
      _
    $region19: #{tpu_custom_call.1} parent=1 // pred_check_branch
      %54 = sbr.rel (0) target = $region21
    $region20: #{tpu_custom_call.1} parent=1 // pred_region
      %55 = dma.done [#allocation4], 256
    $region21: #{tpu_custom_call.1} parent=1 // pred_fallthru
      _
    %56 = vsyncpa [#allocation3], 1
    %57 = vsyncpa [#allocation4], 1

</llo_original>
